<compile_context>
chip_gen: v7x
topology: tpu7x:2x2x1
jax: 0.10.0
libtpu: 0.0.40
codegen_flags: <defaults>
</compile_context>

<pallas_src>
import functools

import jax
import jax.numpy as jnp
from jax import lax
from jax.experimental import pallas as pl
from jax.experimental.pallas import tpu as pltpu

LN_EPS = 1e-5                          # nn.LayerNorm default
_VMEM_LIMIT_BYTES = 48 * 1024 * 1024   # fits v7x (64 MiB) with headroom; lifts v5e/v6e defaults


# ---------------------------------------------------------------------------
# Tile selection helpers (respect the (8, 128) block constraints).
# ---------------------------------------------------------------------------
def _row_tile(n, pref):
    """Largest multiple-of-8 divisor of n that is <= pref, else full n."""
    if n <= pref:
        return n
    t = (pref // 8) * 8
    while t >= 8:
        if n % t == 0:
            return t
        t -= 8
    return n


def _lane_tile(n, pref):
    """Largest multiple-of-128 divisor of n that is <= pref, else full n."""
    if n <= pref:
        return n
    t = (pref // 128) * 128
    while t >= 128:
        if n % t == 0:
            return t
        t -= 128
    return n


# ---------------------------------------------------------------------------
# Host-side parameter folding: LayerNorm affine (and the attention scale for q)
# are folded into the linear weights.
#   LN(x) @ W = norm(x) @ (gamma[:, None] * W) + beta @ W
#   relu(q k^T) * s == relu((s*q) k^T)   for s > 0
# ---------------------------------------------------------------------------
def _fold_params(params, dim, compute_dtype):
    scale = float(dim) ** (-0.5)
    cd = jnp.dtype(compute_dtype)
    gq = params["gq"].reshape(dim, 1)
    gk = params["gk"].reshape(dim, 1)
    gv = params["gv"].reshape(dim, 1)
    wq = (gq * params["wq"]) * scale
    bq = (params["bq"] @ params["wq"]) * scale
    wk = gk * params["wk"]
    bk = params["bk"] @ params["wk"]
    wv = gv * params["wv"]
    bv = params["bv"] @ params["wv"]
    return dict(
        wq=wq.astype(cd), bq=bq.astype(jnp.float32),
        wk=wk.astype(cd), bk=bk.astype(jnp.float32),
        wv=wv.astype(cd), bv=bv.astype(jnp.float32),
        wp=params["wp"].astype(cd), bp=params["bp"].astype(jnp.float32),
    )


# ---------------------------------------------------------------------------
# Kernel 1: fused LayerNorm (affine folded into W/b) + Linear, row-tiled.
# Used to project K and V once so the attention kernel never recomputes them.
# ---------------------------------------------------------------------------
def _ln_proj_kernel(x_ref, w_ref, b_ref, o_ref, *, eps):
    x = x_ref[0].astype(jnp.float32)                     # (T, C)
    mu = jnp.mean(x, axis=-1, keepdims=True)
    xc = x - mu
    var = jnp.mean(xc * xc, axis=-1, keepdims=True)
    xn = xc * lax.rsqrt(var + eps)
    y = jnp.dot(xn.astype(w_ref.dtype), w_ref[...],
                preferred_element_type=jnp.float32) + b_ref[...]
    o_ref[0] = y.astype(o_ref.dtype)


def _ln_proj(x, w, b, out_dtype, *, row_block=None):
    B, N, C = x.shape
    T = row_block if row_block is not None else _row_tile(N, 256)
    assert N % T == 0 and (T == N or T % 8 == 0), (N, T)
    w_bytes = C * C * jnp.dtype(w.dtype).itemsize
    cost = pl.CostEstimate(
        flops=2 * B * N * C * C + 8 * B * N * C,
        transcendentals=B * N,
        bytes_accessed=B * N * C * (x.dtype.itemsize + jnp.dtype(out_dtype).itemsize)
        + w_bytes + C * 4,
    )
    return pl.pallas_call(
        functools.partial(_ln_proj_kernel, eps=LN_EPS),
        out_shape=jax.ShapeDtypeStruct((B, N, C), out_dtype),
        grid_spec=pltpu.PrefetchScalarGridSpec(
            num_scalar_prefetch=0,
            grid=(B, N // T),
            in_specs=[
                pl.BlockSpec((1, T, C), lambda b, t: (b, t, 0)),
                # Constant-index weights: single-buffered (no double buffer).
                pl.BlockSpec((C, C), lambda b, t: (0, 0),
                             pipeline_mode=pl.Buffered(1)),
                pl.BlockSpec((1, C), lambda b, t: (0, 0),
                             pipeline_mode=pl.Buffered(1)),
            ],
            out_specs=pl.BlockSpec((1, T, C), lambda b, t: (b, t, 0)),
        ),
        compiler_params=pltpu.CompilerParams(
            dimension_semantics=("parallel", "parallel"),
            vmem_limit_bytes=_VMEM_LIMIT_BYTES,
        ),
        cost_estimate=cost,
    )(x, w, b)


# ---------------------------------------------------------------------------
# Kernel 2: attention, grid = (B, Q tiles, K tiles), online softmax over K.
# q is LayerNorm+projected in-kernel at the first K step (persistent scratch);
# k/v arrive pre-projected.  `attn` (pre-softmax) tiles are written per K step.
# ---------------------------------------------------------------------------
def _attention_kernel(
    q_ref, k_ref, v_ref,           # (1, TQ, C) raw q; (1, TK, C) projected k, v
    wq_ref, bq_ref,                # folded q weight (C, C) / bias (1, C)
    wp_ref, bp_ref,                # proj weight (C, C) / bias (1, C)
    attn_ref, out_ref,             # (1, TQ, TK), (1, TQ, C)
    qp_sc, m_sc, l_sc, acc_sc,     # VMEM scratch
    *, eps,
):
    ki = pl.program_id(2)

    @pl.when(ki == 0)
    def _init():
        # LayerNorm + projection of the q tile (scale already folded into wq).
        q = q_ref[0].astype(jnp.float32)
        mu = jnp.mean(q, axis=-1, keepdims=True)
        qc = q - mu
        var = jnp.mean(qc * qc, axis=-1, keepdims=True)
        qn = qc * lax.rsqrt(var + eps)
        qp = jnp.dot(qn.astype(wq_ref.dtype), wq_ref[...],
                     preferred_element_type=jnp.float32) + bq_ref[...]
        qp_sc[...] = qp.astype(qp_sc.dtype)
        m_sc[...] = jnp.full(m_sc.shape, -jnp.inf, m_sc.dtype)
        l_sc[...] = jnp.zeros(l_sc.shape, l_sc.dtype)
        acc_sc[...] = jnp.zeros(acc_sc.shape, acc_sc.dtype)

    k = k_ref[0]
    v = v_ref[0]

    # 'qc,kc->qk': contract the channel dims directly -- no explicit transpose.
    logits = lax.dot_general(qp_sc[...], k, (((1,), (1,)), ((), ())),
                             preferred_element_type=jnp.float32)       # (TQ, TK)
    attn = jnp.maximum(logits, 0.0)          # == relu(qk^T) * scale (scale folded)
    attn_ref[0] = attn.astype(attn_ref.dtype)

    # Online softmax accumulation across K tiles.
    m_prev = m_sc[...]
    m_new = jnp.maximum(m_prev, jnp.max(attn, axis=-1, keepdims=True))
    alpha = jnp.exp(m_prev - m_new)
    p = jnp.exp(attn - m_new)
    l_sc[...] = alpha * l_sc[...] + jnp.sum(p, axis=-1, keepdims=True)
    acc_sc[...] = alpha * acc_sc[...] + jnp.dot(
        p.astype(v.dtype), v, preferred_element_type=jnp.float32)
    m_sc[...] = m_new

    @pl.when(ki == pl.num_programs(2) - 1)
    def _finalize():
        o = acc_sc[...] * pl.reciprocal(l_sc[...], approx=True)
        o = jnp.dot(o.astype(wp_ref.dtype), wp_ref[...],
                    preferred_element_type=jnp.float32) + bp_ref[...]
        out_ref[0] = o.astype(out_ref.dtype)


# ---------------------------------------------------------------------------
# Public wrapper.
# ---------------------------------------------------------------------------
def any_attention(q, k, v, params, *, compute_dtype=jnp.float32,
                  q_block=None, k_block=None):
    """q: (B, Q, C); k, v: (B, K, C). Returns (attn (B,Q,K), out (B,Q,C))."""
    B, Qn, C = q.shape
    Kn = k.shape[1]
    cd = jnp.dtype(compute_dtype)

    f = _fold_params(params, C, cd)

    # Pre-project K and V exactly once (not per Q tile).
    kp = _ln_proj(k, f["wk"], f["bk"], cd)
    vp = _ln_proj(v, f["wv"], f["bv"], cd)

    TQ = q_block if q_block is not None else _row_tile(Qn, 256)
    TK = k_block if k_block is not None else _lane_tile(Kn, 512)
    assert Qn % TQ == 0 and (TQ == Qn or TQ % 8 == 0), (Qn, TQ)
    assert Kn % TK == 0 and (TK == Kn or TK % 128 == 0), (Kn, TK)
    grid = (B, Qn // TQ, Kn // TK)

    def _const_spec(shape):
        return pl.BlockSpec(shape, lambda b, qi, ki: tuple(0 for _ in shape),
                            pipeline_mode=pl.Buffered(1))

    isz = cd.itemsize
    cost = pl.CostEstimate(
        flops=4 * B * Qn * Kn * C + 4 * B * Qn * C * C + 6 * B * Qn * Kn,
        transcendentals=B * Qn * Kn + 2 * B * Qn,
        bytes_accessed=(B * Qn * C * 4 + 2 * B * Kn * C * isz
                        + B * Qn * Kn * 4 + B * Qn * C * 4
                        + 2 * C * C * isz + 2 * C * 4),
    )

    attn, out = pl.pallas_call(
        functools.partial(_attention_kernel, eps=LN_EPS),
        out_shape=(
            jax.ShapeDtypeStruct((B, Qn, Kn), jnp.float32),
            jax.ShapeDtypeStruct((B, Qn, C), jnp.float32),
        ),
        grid_spec=pltpu.PrefetchScalarGridSpec(
            num_scalar_prefetch=0,
            grid=grid,
            in_specs=[
                pl.BlockSpec((1, TQ, C), lambda b, qi, ki: (b, qi, 0)),
                pl.BlockSpec((1, TK, C), lambda b, qi, ki: (b, ki, 0)),
                pl.BlockSpec((1, TK, C), lambda b, qi, ki: (b, ki, 0)),
                _const_spec((C, C)),   # wq (gamma * scale folded in)
                _const_spec((1, C)),   # bq (beta @ wq * scale)
                _const_spec((C, C)),   # wp
                _const_spec((1, C)),   # bp
            ],
            out_specs=[
                pl.BlockSpec((1, TQ, TK), lambda b, qi, ki: (b, qi, ki)),
                pl.BlockSpec((1, TQ, C), lambda b, qi, ki: (b, qi, 0)),
            ],
            scratch_shapes=[
                pltpu.VMEM((TQ, C), cd),           # projected q tile
                pltpu.VMEM((TQ, 1), jnp.float32),  # running max
                pltpu.VMEM((TQ, 1), jnp.float32),  # running denominator
                pltpu.VMEM((TQ, C), jnp.float32),  # output accumulator
            ],
        ),
        compiler_params=pltpu.CompilerParams(
            dimension_semantics=("parallel", "parallel", "arbitrary"),
            vmem_limit_bytes=_VMEM_LIMIT_BYTES,
        ),
        cost_estimate=cost,
    )(q, kp, vp, f["wq"], f["bq"], f["wp"], f["bp"])
    return attn, out


# ---------------------------------------------------------------------------
# Synthetic parameters + pure-JAX reference (mirrors the PyTorch forward).
# ---------------------------------------------------------------------------
def make_params(key, dim):
    ks = jax.random.split(key, 11)
    std = dim ** (-0.5)
    # nn.Linear stores weight as (out, in); we pre-transpose to (in, out).
    wq = (jax.random.normal(ks[0], (dim, dim), jnp.float32) * std).T
    wk = (jax.random.normal(ks[1], (dim, dim), jnp.float32) * std).T
    wv = (jax.random.normal(ks[2], (dim, dim), jnp.float32) * std).T
    wp = (jax.random.normal(ks[3], (dim, dim), jnp.float32) * std).T
    bp = jax.random.normal(ks[4], (1, dim), jnp.float32) * 0.02
    # Non-trivial LN affine so the weight-folding path is actually exercised.
    gq = 1.0 + 0.1 * jax.random.normal(ks[5], (1, dim), jnp.float32)
    bq = 0.05 * jax.random.normal(ks[6], (1, dim), jnp.float32)
    gk = 1.0 + 0.1 * jax.random.normal(ks[7], (1, dim), jnp.float32)
    bk = 0.05 * jax.random.normal(ks[8], (1, dim), jnp.float32)
    gv = 1.0 + 0.1 * jax.random.normal(ks[9], (1, dim), jnp.float32)
    bv = 0.05 * jax.random.normal(ks[10], (1, dim), jnp.float32)
    return dict(gq=gq, bq=bq, gk=gk, bk=bk, gv=gv, bv=bv,
                wq=wq, wk=wk, wv=wv, wp=wp, bp=bp)


def _reference(q, k, v, params):
    def ln(x, g, b):
        mu = jnp.mean(x, -1, keepdims=True)
        var = jnp.mean((x - mu) ** 2, -1, keepdims=True)
        return (x - mu) / jnp.sqrt(var + LN_EPS) * g + b
    C = q.shape[-1]
    qn = ln(q, params["gq"], params["bq"]) @ params["wq"]
    kn = ln(k, params["gk"], params["bk"]) @ params["wk"]
    vn = ln(v, params["gv"], params["bv"]) @ params["wv"]
    attn = jnp.einsum("bqc,bkc->bqk", qn, kn)
    attn = jax.nn.relu(attn) * (C ** -0.5)
    mask = jax.nn.softmax(attn, axis=-1)
    out = jnp.einsum("bqk,bkc->bqc", mask, vn) @ params["wp"] + params["bp"]
    return attn, out


if __name__ == "__main__":
    key = jax.random.PRNGKey(0)

    def run_case(B, Qn, Kn, C, *, compute_dtype, q_block=None, k_block=None,
                 tol_attn, tol_out, case_id=0):
        kq, kk, kv, kparams = jax.random.split(jax.random.fold_in(key, case_id), 4)
        q = jax.random.normal(kq, (B, Qn, C), jnp.float32)
        k = jax.random.normal(kk, (B, Kn, C), jnp.float32)
        v = jax.random.normal(kv, (B, Kn, C), jnp.float32)
        params = make_params(kparams, C)
        attn, out = any_attention(q, k, v, params, compute_dtype=compute_dtype,
                                  q_block=q_block, k_block=k_block)
        jax.block_until_ready((attn, out))
        attn_ref, out_ref = _reference(q, k, v, params)
        assert jnp.allclose(attn, attn_ref, atol=tol_attn, rtol=tol_attn), \
            f"attn mismatch (case {case_id})"
        # out tolerance is looser than attn because of the approx reciprocal
        # (EUP vrcp) used for the softmax normalizer.
        assert jnp.allclose(out, out_ref, atol=tol_out, rtol=tol_out), \
            f"out mismatch (case {case_id})"

    # 1) Small single-tile case, strict f32 check.
    run_case(2, 8, 16, 32, compute_dtype=jnp.float32,
             tol_attn=1e-4, tol_out=5e-3, case_id=0)
    # 2) Multi-tile case: exercises Q tiling + K tiling (online softmax),
    #    grid = (1, 2, 2), lane-dense 128-wide attn tiles.
    run_case(1, 16, 256, 32, compute_dtype=jnp.float32, q_block=8, k_block=128,
             tol_attn=1e-4, tol_out=5e-3, case_id=1)
    # 3) bf16 MXU operands with f32 accumulation (production path), looser check.
    run_case(2, 8, 16, 32, compute_dtype=jnp.bfloat16,
             tol_attn=7e-2, tol_out=7e-2, case_id=2)

    print("KERNEL_OK")
</pallas_src>

<mosaic_0001>
module attributes {stable_mosaic.version = 11 : i64} {
  func.func @_ln_proj_kernel(%arg0: i32, %arg1: i32, %arg2: memref<1x16x32xf32, #tpu.memory_space<vmem>>, %arg3: memref<32x32xf32, #tpu.memory_space<vmem>>, %arg4: memref<1x32xf32, #tpu.memory_space<vmem>>, %arg5: memref<1x16x32xf32, #tpu.memory_space<vmem>>) attributes {dimension_semantics = [#tpu.dimension_semantics<parallel>, #tpu.dimension_semantics<parallel>], iteration_bounds = array<i64: 2, 1>, scalar_prefetch = 0 : i64, scratch_operands = 0 : i64, tpu.core_type = #tpu.core_type<tc>, window_params = [{transform_indices = @transform_0, window_bounds = array<i64: 1, 16, 32>}, {pipeline_mode = #tpu.pipeline_mode<synchronous>, transform_indices = @transform_1, window_bounds = array<i64: 32, 32>}, {pipeline_mode = #tpu.pipeline_mode<synchronous>, transform_indices = @transform_2, window_bounds = array<i64: 1, 32>}, {transform_indices = @transform_3, window_bounds = array<i64: 1, 16, 32>}]} {
    %c0 = arith.constant 0 : index
    %c0_0 = arith.constant 0 : index
    %c0_1 = arith.constant 0 : index
    %0 = vector.load %arg2[%c0, %c0_0, %c0_1] : memref<1x16x32xf32, #tpu.memory_space<vmem>>, vector<1x16x32xf32>
    %1 = vector.shape_cast %0 : vector<1x16x32xf32> to vector<16x32xf32>
    %cst = arith.constant dense<0.000000e+00> : vector<16xf32>
    %2 = vector.multi_reduction <add>, %1, %cst [1] : vector<16x32xf32> to vector<16xf32>
    %3 = vector.shape_cast %2 : vector<16xf32> to vector<16x1xf32>
    %cst_2 = arith.constant 3.200000e+01 : f32
    %4 = vector.broadcast %cst_2 : f32 to vector<16x1xf32>
    %5 = arith.divf %3, %4 : vector<16x1xf32>
    %6 = vector.broadcast %5 : vector<16x1xf32> to vector<16x32xf32>
    %7 = arith.subf %1, %6 : vector<16x32xf32>
    %8 = arith.mulf %7, %7 : vector<16x32xf32>
    %cst_3 = arith.constant dense<0.000000e+00> : vector<16xf32>
    %9 = vector.multi_reduction <add>, %8, %cst_3 [1] : vector<16x32xf32> to vector<16xf32>
    %10 = vector.shape_cast %9 : vector<16xf32> to vector<16x1xf32>
    %cst_4 = arith.constant 3.200000e+01 : f32
    %11 = vector.broadcast %cst_4 : f32 to vector<16x1xf32>
    %12 = arith.divf %10, %11 : vector<16x1xf32>
    %cst_5 = arith.constant 9.99999974E-6 : f32
    %13 = vector.broadcast %cst_5 : f32 to vector<16x1xf32>
    %14 = arith.addf %12, %13 : vector<16x1xf32>
    %15 = math.rsqrt %14 : vector<16x1xf32>
    %16 = vector.broadcast %15 : vector<16x1xf32> to vector<16x32xf32>
    %17 = arith.mulf %7, %16 : vector<16x32xf32>
    %c0_6 = arith.constant 0 : index
    %c0_7 = arith.constant 0 : index
    %18 = vector.load %arg3[%c0_6, %c0_7] : memref<32x32xf32, #tpu.memory_space<vmem>>, vector<32x32xf32>
    %cst_8 = arith.constant dense<0.000000e+00> : vector<16x32xf32>
    %19 = tpu.matmul %17, %18, %cst_8 {dimension_numbers = #tpu.dot_dimension_numbers<[1], [0], [0], [1], [0, 0, 1, 1], [], []>} : vector<16x32xf32>, vector<32x32xf32>, vector<16x32xf32> -> vector<16x32xf32>
    %c0_9 = arith.constant 0 : index
    %c0_10 = arith.constant 0 : index
    %20 = vector.load %arg4[%c0_9, %c0_10] : memref<1x32xf32, #tpu.memory_space<vmem>>, vector<1x32xf32>
    %21 = vector.broadcast %20 : vector<1x32xf32> to vector<16x32xf32>
    %22 = arith.addf %19, %21 : vector<16x32xf32>
    %c0_11 = arith.constant 0 : index
    %c0_12 = arith.constant 0 : index
    %c0_13 = arith.constant 0 : index
    %23 = vector.load %arg5[%c0_11, %c0_12, %c0_13] : memref<1x16x32xf32, #tpu.memory_space<vmem>>, vector<1x16x32xf32>
    %24 = vector.shape_cast %23 : vector<1x16x32xf32> to vector<16x32xf32>
    %25 = vector.shape_cast %22 : vector<16x32xf32> to vector<1x16x32xf32>
    tpu.vector_store %arg5[%c0_11, %c0_12, %c0_13], %25 {strides = array<i32>} : memref<1x16x32xf32, #tpu.memory_space<vmem>>, vector<1x16x32xf32>,
    return
  }
  func.func @transform_0(%arg0: i32, %arg1: i32) -> (i32, i32, i32) {
    %c0_i32 = arith.constant 0 : i32
    %c0_i32_0 = arith.constant 0 : i32
    return %arg0, %arg1, %c0_i32 : i32, i32, i32
  }
  func.func @transform_1(%arg0: i32, %arg1: i32) -> (i32, i32) {
    %c0_i32 = arith.constant 0 : i32
    %c0_i32_0 = arith.constant 0 : i32
    %c0_i32_1 = arith.constant 0 : i32
    return %c0_i32, %c0_i32_0 : i32, i32
  }
  func.func @transform_2(%arg0: i32, %arg1: i32) -> (i32, i32) {
    %c0_i32 = arith.constant 0 : i32
    %c0_i32_0 = arith.constant 0 : i32
    %c0_i32_1 = arith.constant 0 : i32
    return %c0_i32, %c0_i32_0 : i32, i32
  }
  func.func @transform_3(%arg0: i32, %arg1: i32) -> (i32, i32, i32) {
    %c0_i32 = arith.constant 0 : i32
    %c0_i32_0 = arith.constant 0 : i32
    return %arg0, %arg1, %c0_i32 : i32, i32, i32
  }
}

</mosaic_0001>

<llo_original>
// kernel: tpu_custom_call.1
$region0: #{tpu_custom_call.1}
  #allocation0 [shape = 'u32[]', space=smem, size = 0x4, offset = 0x4, fixed_abs, tag = 'smem constant byte address 0x4 - core index']
  #allocation1 [shape = 'u32[144,128]{1,0:T(1,128)}', space=vmem, size = 0x12000, scoped, tag = 'internal scratch']
  %s0 = inlined_call_operand.hbm [shape: f32[2,16,32], index: 0, kind: input, shape index: {}]
  %s1 = inlined_call_operand.hbm [shape: f32[32,32], index: 1, kind: input, shape index: {}]
  %s2 = inlined_call_operand.vmem [shape: f32[1,32], index: 2, kind: input, shape index: {}]
  %s3 = inlined_call_operand.hbm [shape: f32[2,16,32], index: 3, kind: output, shape index: {}]
  %s4 = sld [smem:[#allocation0]]
  $region53: #{tpu_custom_call.1} parent=0
    _
  %s6 = ssub.s32 1, %s4
  %s7 = scalar_select 0, %s6, %s4
  $region1: #{tpu_custom_call.1} parent=0
    #allocation2 [shape = 'u8[16384]{0}', space=vmem, size = 0x4000, scoped, tag = 'input window, operand 0']
    #allocation3 [shape = 's32[2]{0}', space=sflag, size = 0x8, scoped, tag = 'scoped memory for tpu_custom_call.1']
    #allocation4 [shape = 's32[2]{0}', space=sflag, size = 0x8, scoped, tag = 'scoped memory for tpu_custom_call.1']
    #allocation5 [shape = 'u8[16384]{0}', space=vmem, size = 0x4000, scoped, tag = 'input window, operand 1, single buffered']
    #allocation6 [shape = 's32[1]{0}', space=sflag, size = 0x4, scoped, tag = 'scoped memory for tpu_custom_call.1']
    #allocation7 [shape = 'u8[16384]{0}', space=vmem, size = 0x4000, scoped, tag = 'output window, operand 0']
    %8 = vsyncpa [#allocation3], 0
    %s9 = scalar_lea.sflag [#allocation3], 1
    %10 = vsyncpa %s9, 0
    %11 = vsyncpa [#allocation6], 0
    %12 = vsyncpa [#allocation4], 0
    %s13 = scalar_lea.sflag [#allocation4], 1
    %14 = vsyncpa %s13, 0
    loop: start=0, step=1, limit=4
    $region2: #{tpu_custom_call.1} parent=1 // loop_pre_header
      _
    $region3: #{tpu_custom_call.1} parent=1 // loop_header
      %s16 = sphi 0, %s20
      %p17 = scmp.ge.s32.totalorder %s16, 4
      %s23 = sphi 0, %s35
      %s24 = sphi 0, %s31
      %s25 = sphi 0, %s23
      %s26 = sphi 0, %s24
      %s27 = sphi 0, %s25
      %s28 = sphi 0, %s26
      %s40 = sphi 0, %s42
      %s43 = sphi 0, %s40
      %s44 = sphi 0, %s43
      %s60 = sphi 0, %s44
      %s64 = sphi 0, %s64
      %s66 = sphi 0, %s64
      %s67 = sphi 0, %s66
      %s81 = sphi 0, %s67
      %s85 = sphi 0, %s85
      %s87 = sphi 0, %s85
      %s88 = sphi 0, %s87
      %s102 = sphi 0, %s88
      %s110 = sphi 0, %s112
      %s113 = sphi 0, %s110
      %s114 = sphi 0, %s113
      %s130 = sphi 0, %s114
    $region4: #{tpu_custom_call.1} parent=1 // loop_header_branch
      %19 = sbr.rel (%p17) target = $region8
    $region5: #{tpu_custom_call.1} parent=1 // loop_body
      %s21 = ssub.s32 %s16, 1
      %s22 = ssub.s32 %s16, 2
      %s29 = sadd.s32 1, %s24
      %p30 = scmp.ge.s32.totalorder %s29, 1
      %s31 = scalar_select %p30, 0, %s29
      %s32 = sadd.s32 1, %s23
      %s33 = scalar_select %p30, %s32, %s23
      %p34 = scmp.ge.s32.totalorder %s33, 2
      %s35 = scalar_select %p34, 0, %s33
      %s36 = ssub.s32 %s23, %s35
      %s37 = ssub.s32 %s24, %s31
      %s38 = sor.u32 %s36, %s37
      %p39 = scmp.eq.s32.totalorder %s38, 0
      %s41 = sadd.s32 %s40, 1
      %s42 = scalar_select %p39, %s40, %s41
      %p45 = pneg %p39
      %p46 = scmp.eq.s32.totalorder %s16, 1
      %p47 = por %p45, %p46
      %p48 = scmp.ne.s32.totalorder %s40, %s43
      %p49 = scmp.eq.s32.totalorder %s16, 0
      %p50 = por %p48, %p49
      %p51 = scmp.ne.s32.totalorder %s40, %s43
      %p52 = scmp.eq.s32.totalorder %s21, 1
      %p53 = por %p51, %p52
      %p54 = scmp.ne.s32.totalorder %s43, %s44
      %p55 = scmp.eq.s32.totalorder %s21, 0
      %p56 = por %p54, %p55
      %p57 = scmp.ne.s32.totalorder %s43, %s44
      %p58 = scmp.eq.s32.totalorder %s22, 1
      %p59 = por %p57, %p58
      %p61 = scmp.ne.s32.totalorder %s44, %s60
      %p62 = scmp.eq.s32.totalorder %s22, 0
      %p63 = por %p61, %p62
      %s65 = sadd.s32 %s64, 1
      %p68 = scmp.eq.s32.totalorder %s16, 1
      %p69 = scmp.ne.s32.totalorder %s64, %s66
      %p70 = scmp.eq.s32.totalorder %s16, 0
      %p71 = por %p69, %p70
      %p72 = scmp.ne.s32.totalorder %s64, %s66
      %p73 = scmp.eq.s32.totalorder %s21, 1
      %p74 = por %p72, %p73
      %p75 = scmp.ne.s32.totalorder %s66, %s67
      %p76 = scmp.eq.s32.totalorder %s21, 0
      %p77 = por %p75, %p76
      %p78 = scmp.ne.s32.totalorder %s66, %s67
      %p79 = scmp.eq.s32.totalorder %s22, 1
      %p80 = por %p78, %p79
      %p82 = scmp.ne.s32.totalorder %s67, %s81
      %p83 = scmp.eq.s32.totalorder %s22, 0
      %p84 = por %p82, %p83
      %s86 = sadd.s32 %s85, 1
      %p89 = scmp.eq.s32.totalorder %s16, 1
      %p90 = scmp.ne.s32.totalorder %s85, %s87
      %p91 = scmp.eq.s32.totalorder %s16, 0
      %p92 = por %p90, %p91
      %p93 = scmp.ne.s32.totalorder %s85, %s87
      %p94 = scmp.eq.s32.totalorder %s21, 1
      %p95 = por %p93, %p94
      %p96 = scmp.ne.s32.totalorder %s87, %s88
      %p97 = scmp.eq.s32.totalorder %s21, 0
      %p98 = por %p96, %p97
      %p99 = scmp.ne.s32.totalorder %s87, %s88
      %p100 = scmp.eq.s32.totalorder %s22, 1
      %p101 = por %p99, %p100
      %p103 = scmp.ne.s32.totalorder %s88, %s102
      %p104 = scmp.eq.s32.totalorder %s22, 0
      %p105 = por %p103, %p104
      %s106 = ssub.s32 %s23, %s35
      %s107 = ssub.s32 %s24, %s31
      %s108 = sor.u32 %s106, %s107
      %p109 = scmp.eq.s32.totalorder %s108, 0
      %s111 = sadd.s32 %s110, 1
      %s112 = scalar_select %p109, %s110, %s111
      %p115 = pneg %p109
      %p116 = scmp.eq.s32.totalorder %s16, 1
      %p117 = por %p115, %p116
      %p118 = scmp.ne.s32.totalorder %s110, %s113
      %p119 = scmp.eq.s32.totalorder %s16, 0
      %p120 = por %p118, %p119
      %p121 = scmp.ne.s32.totalorder %s110, %s113
      %p122 = scmp.eq.s32.totalorder %s21, 1
      %p123 = por %p121, %p122
      %p124 = scmp.ne.s32.totalorder %s113, %s114
      %p125 = scmp.eq.s32.totalorder %s21, 0
      %p126 = por %p124, %p125
      %p127 = scmp.ne.s32.totalorder %s113, %s114
      %p128 = scmp.eq.s32.totalorder %s22, 1
      %p129 = por %p127, %p128
      %p131 = scmp.ne.s32.totalorder %s114, %s130
      %p132 = scmp.eq.s32.totalorder %s22, 0
      %p133 = por %p131, %p132
      %p134 = scmp.le.s32.totalorder 1, %s16
      %p135 = scmp.lt.s32.totalorder %s16, 3
      %p136 = pnand %p134, %p135
      %p137 = pneg %p136
      // Predicated region
      $region9: #{tpu_custom_call.1} parent=5 // pred_check
        _
      $region10: #{tpu_custom_call.1} parent=5 // pred_check_branch
        %139 = sbr.rel (%p136) target = $region12
      $region11: #{tpu_custom_call.1} parent=5 // pred_region
        %s140 = ssub.s32 %s16, 1
        // Predicated region
        $region13: #{tpu_custom_call.1} parent=11 // pred_check
          %p141 = pneg %p77
        $region14: #{tpu_custom_call.1} parent=11 // pred_check_branch
          %143 = sbr.rel (%p141) target = $region16
        $region15: #{tpu_custom_call.1} parent=11 // pred_region
          %s145 = ssub.s32 512, 512
          %146 = vsyncadd [#allocation6], %s145
          %s147 = sshll.u32 [#allocation5], 4
          %s148 = int_to_ptr.vmem [resolvable:$true] %s147
          %153 = dma.hbm_to_vmem [thread:$0]  %s1, 512, %s148, [#allocation6], 128, 128, 8
        $region16: #{tpu_custom_call.1} parent=11 // pred_fallthru
          _
        // Predicated region
        $region17: #{tpu_custom_call.1} parent=11 // pred_check
          %p154 = pneg %p98
        $region18: #{tpu_custom_call.1} parent=11 // pred_check_branch
          %156 = sbr.rel (%p154) target = $region20
        $region19: #{tpu_custom_call.1} parent=11 // pred_region
          _
        $region20: #{tpu_custom_call.1} parent=11 // pred_fallthru
          _
      $region12: #{tpu_custom_call.1} parent=5 // pred_fallthru
        _
      %p157 = scmp.lt.s32.totalorder %s16, 2
      // Predicated region
      $region21: #{tpu_custom_call.1} parent=5 // pred_check
        %p158 = pneg %p157
      $region22: #{tpu_custom_call.1} parent=5 // pred_check_branch
        %160 = sbr.rel (%p158) target = $region24
      $region23: #{tpu_custom_call.1} parent=5 // pred_region
        // Predicated region
        $region25: #{tpu_custom_call.1} parent=23 // pred_check
          %p161 = pneg %p50
        $region26: #{tpu_custom_call.1} parent=23 // pred_check_branch
          %163 = sbr.rel (%p161) target = $region28
        $region27: #{tpu_custom_call.1} parent=23 // pred_region
          %s164 = sand.u32 %s40, 1
          %s165 = scalar_lea.sflag [#allocation3], %s164
          %s166 = sand.u32 %s40, 1
          %s167 = smul.addr %s166, 16
          %s168 = scalar_lea.vmem [#allocation2], %s167
          %s169 = smul.u32 2, %s24
          %s171 = ssub.s32 256, 256
          %172 = vsyncadd %s165, %s171
          %s173 = smul.addr %s23, 2
          %s174 = sadd.s32 %s169, %s173
          %s175 = smul.addr %s174, 128
          %s176 = scalar_lea.hbm %s0, %s175
          %s177 = sshll.u32 %s168, 4
          %s178 = int_to_ptr.vmem [resolvable:$true] %s177
          %183 = dma.hbm_to_vmem [thread:$0]  %s176, 256, %s178, %s165, 128, 128, 8
        $region28: #{tpu_custom_call.1} parent=23 // pred_fallthru
          _
      $region24: #{tpu_custom_call.1} parent=5 // pred_fallthru
        _
      %p184 = scmp.le.s32.totalorder 1, %s16
      %p185 = scmp.lt.s32.totalorder %s16, 3
      %p186 = pnand %p184, %p185
      %p187 = pneg %p186
      // Predicated region
      $region29: #{tpu_custom_call.1} parent=5 // pred_check
        _
      $region30: #{tpu_custom_call.1} parent=5 // pred_check_branch
        %189 = sbr.rel (%p186) target = $region32
      $region31: #{tpu_custom_call.1} parent=5 // pred_region
        %s190 = ssub.s32 %s16, 1
        %s191 = sand.u32 %s43, 1
        %s192 = scalar_lea.sflag [#allocation3], %s191
        %s193 = sand.u32 %s43, 1
        %s194 = smul.addr %s193, 16
        %s195 = scalar_lea.vmem [#allocation2], %s194
        // Predicated region
        $region33: #{tpu_custom_call.1} parent=31 // pred_check
          %p196 = pneg %p56
        $region34: #{tpu_custom_call.1} parent=31 // pred_check_branch
          %198 = sbr.rel (%p196) target = $region36
        $region35: #{tpu_custom_call.1} parent=31 // pred_region
          %199 = dma.done %s192, 256
        $region36: #{tpu_custom_call.1} parent=31 // pred_fallthru
          _
        // Predicated region
        $region37: #{tpu_custom_call.1} parent=31 // pred_check
          %p200 = pneg %p77
        $region38: #{tpu_custom_call.1} parent=31 // pred_check_branch
          %202 = sbr.rel (%p200) target = $region40
        $region39: #{tpu_custom_call.1} parent=31 // pred_region
          %203 = dma.done [#allocation6], 512
        $region40: #{tpu_custom_call.1} parent=31 // pred_fallthru
          _
        %s204 = sand.u32 %s43, 1
        %s205 = scalar_lea.sflag [#allocation3], %s204
        %s206 = sand.u32 %s43, 1
        %s207 = smul.addr %s206, 16
        %s208 = scalar_lea.vmem [#allocation2], %s207
        %p209 = pneg %p56
        %p210 = pneg %p53
        %p211 = pneg %p77
        %p212 = pneg %p74
        %p213 = pneg %p98
        %p214 = pneg %p95
        %p215 = pneg %p126
        %p216 = pneg %p123
        %s217 = sand.u32 %s113, 1
        %s218 = scalar_lea.sflag [#allocation4], %s217
        %s219 = sand.u32 %s113, 1
        %s220 = smul.addr %s219, 16
        %s221 = scalar_lea.vmem [#allocation7], %s220
        %s222 = smul.u32 2, %s26
        %s223 = smul.u32 2, %s26
        %v224 = vld [vmem:[%s195] sm:$0xff]
        %v225 = vld [vmem:[%s195 + $0x8] sm:$0xff]
        %vm226 = vcmask 261120
        %v227 = vsel %vm226, %v224, 0.0
        %228 = vadd.xlane.f32.xlu0 %v227
        %v229 = vpop.xlane.xlu0 %228
        %v230 = vsel %vm226, %v225, 0.0
        %231 = vadd.xlane.f32.xlu0 %v230
        %v232 = vpop.xlane.xlu0 %231
        %v233 = vrcp.pop 32.0
        %v234 = vmul.f32 %v229, %v233
        %v235 = vmul.f32 %v232, %v233
        %v236 = vsub.f32 %v224, %v234
        %v237 = vsub.f32 %v225, %v235
        %v238 = vmul.f32 %v236, %v236
        %v239 = vmul.f32 %v237, %v237
        %v240 = vsel %vm226, %v238, 0.0
        %241 = vadd.xlane.f32.xlu0 %v240
        %v242 = vpop.xlane.xlu0 %241
        %v243 = vsel %vm226, %v239, 0.0
        %244 = vadd.xlane.f32.xlu0 %v243
        %v245 = vpop.xlane.xlu0 %244
        %v246 = vmul.f32 %v242, %v233
        %v247 = vmul.f32 %v245, %v233
        %v248 = vadd.f32 %v246, 1e-05
        %v249 = vadd.f32 %v247, 1e-05
        %v250 = vrsqrt.pop %v248
        %v251 = vrsqrt.pop %v249
        %v252 = vmul.f32 %v236, %v250
        %v253 = vmul.f32 %v237, %v251
        %v254 = vld [vmem:[#allocation5] sm:$0xff]
        %v255 = vld [vmem:[#allocation5 + $0x8] sm:$0xff]
        %v256 = vld [vmem:[#allocation5 + $0x10] sm:$0xff]
        %v257 = vld [vmem:[#allocation5 + $0x18] sm:$0xff]
        %v258 = vld [vmem:[%s2] sm:$0x1]
        %v260 = vlaneseq
        %v261 = vshrl.u32 %v260, 7
        %v262 = vsub.s32 0, %v261
        %v263 = vrot.slane %v258, %v262
        %v266 = vsel %vm226, %v252, 0
        %v269 = vsel %vm226, %v253, 0
        %271 = vmatprep.subr.mxu0 0.0
        %272 = vmatpush1.msra.mxu0 %v254
        %273 = vmatprep.subr.mxu0 0.0
        %274 = vmatpush1.msra.mxu0 %v255
        %275 = vmatprep.subr.mxu0 0.0
        %276 = vmatpush1.msra.mxu0 %v256
        %277 = vmatprep.subr.mxu0 0.0
        %278 = vmatpush1.msra.mxu0 %v257
        %279 = vmatprep.subr.mxu0 0.0
        %280 = vmatpush1.msra.mxu0 0.0
        %281 = vmatprep.subr.mxu0 0.0
        %282 = vmatpush1.msra.mxu0 0.0
        %283 = vmatprep.subr.mxu0 0.0
        %284 = vmatpush1.msra.mxu0 0.0
        %285 = vmatprep.subr.mxu0 0.0
        %286 = vmatpush1.msra.mxu0 0.0
        %287 = vmatprep.subr.mxu0 0.0
        %288 = vmatpush1.msra.mxu0 0.0
        %289 = vmatprep.subr.mxu0 0.0
        %290 = vmatpush1.msra.mxu0 0.0
        %291 = vmatprep.subr.mxu0 0.0
        %292 = vmatpush1.msra.mxu0 0.0
        %293 = vmatprep.subr.mxu0 0.0
        %294 = vmatpush1.msra.mxu0 0.0
        %295 = vmatprep.subr.mxu0 0.0
        %296 = vmatpush1.msra.mxu0 0.0
        %297 = vmatprep.subr.mxu0 0.0
        %298 = vmatpush1.msra.mxu0 0.0
        %299 = vmatprep.subr.mxu0 0.0
        %300 = vmatpush1.msra.mxu0 0.0
        %301 = vmatprep.subr.mxu0 0.0
        %302 = vmatpush1.msra.mxu0 0.0
        %303 = vmatprep.subr.mxu0 0.0
        %304 = vmatpush1.msra.mxu0 0.0
        %305 = vmatprep.subr.mxu0 0.0
        %306 = vmatpush1.msra.mxu0 0.0
        %307 = vmatprep.subr.mxu0 0.0
        %308 = vmatpush1.msra.mxu0 0.0
        %309 = vmatprep.subr.mxu0 0.0
        %310 = vmatpush1.msra.mxu0 0.0
        %311 = vmatprep.subr.mxu0 0.0
        %312 = vmatpush1.msra.mxu0 0.0
        %313 = vmatprep.subr.mxu0 0.0
        %314 = vmatpush1.msra.mxu0 0.0
        %315 = vmatprep.subr.mxu0 0.0
        %316 = vmatpush1.msra.mxu0 0.0
        %317 = vmatprep.subr.mxu0 0.0
        %318 = vmatpush1.msra.mxu0 0.0
        %319 = vmatprep.subr.mxu0 0.0
        %320 = vmatpush1.msra.mxu0 0.0
        %321 = vmatprep.subr.mxu0 0.0
        %322 = vmatpush1.msra.mxu0 0.0
        %323 = vmatprep.subr.mxu0 0.0
        %324 = vmatpush1.msra.mxu0 0.0
        %325 = vmatprep.subr.mxu0 0.0
        %326 = vmatpush1.msra.mxu0 0.0
        %327 = vmatprep.subr.mxu0 0.0
        %328 = vmatpush1.msra.mxu0 0.0
        %329 = vmatprep.subr.mxu0 0.0
        %330 = vmatpush1.msra.mxu0 0.0
        %331 = vmatprep.subr.mxu0 0.0
        %332 = vmatpush1.msra.mxu0 0.0
        %333 = vmatprep.subr.mxu0 0.0
        %334 = vmatpush1.msra.mxu0 0.0
        %335 = vmatprep.mubr.f32.mxu0 0.0
        %336 = vmatmul.mubr.f32.gmra.mrb[0].mxu0 %v266
        %v337 = vpop.f32.mrb[0].mxu0
        %v338 = vadd.f32 %v263, %v337
        %v339 = vpop.f32.mrb[0].mxu0
        %340 = vmatprep.mubr.f32.mxu0 0.0
        %341 = vmatmul.mubr.f32.gmra.mrb[0].mxu0 %v269
        %v342 = vpop.f32.mrb[0].mxu0
        %v343 = vadd.f32 %v263, %v342
        %v344 = vpop.f32.mrb[0].mxu0
        %345 = vdwg.mxu0
        %346 = vst.msk [vmem:[%s221] sm:$0xff] %vm226, %v338
        %347 = vst.msk [vmem:[%s221 + $0x8] sm:$0xff] %vm226, %v343
        %s348 = sand.u32 %s113, 1
        %s349 = scalar_lea.sflag [#allocation4], %s348
        %s350 = sand.u32 %s113, 1
        %s351 = smul.addr %s350, 16
        %s352 = scalar_lea.vmem [#allocation7], %s351
        // Predicated region
        $region41: #{tpu_custom_call.1} parent=31 // pred_check
          %p353 = pneg %p123
        $region42: #{tpu_custom_call.1} parent=31 // pred_check_branch
          %355 = sbr.rel (%p353) target = $region44
        $region43: #{tpu_custom_call.1} parent=31 // pred_region
          %s356 = smul.u32 2, %s26
          %s358 = ssub.s32 256, 256
          %359 = vsyncadd %s349, %s358
          %s360 = smul.addr %s25, 2
          %s361 = sadd.s32 %s356, %s360
          %s362 = smul.addr %s361, 128
          %s363 = scalar_lea.hbm %s3, %s362
          %s364 = sshll.u32 %s352, 4
          %s365 = int_to_ptr.vmem [resolvable:$true] %s364
          %370 = dma.vmem_to_hbm [thread:$0]  %s365, 256, %s363, %s349, 128, 128, 8
        $region44: #{tpu_custom_call.1} parent=31 // pred_fallthru
          _
      $region32: #{tpu_custom_call.1} parent=5 // pred_fallthru
        _
      %p371 = scmp.le.s32.totalorder 2, %s16
      // Predicated region
      $region45: #{tpu_custom_call.1} parent=5 // pred_check
        %p372 = pneg %p371
      $region46: #{tpu_custom_call.1} parent=5 // pred_check_branch
        %374 = sbr.rel (%p372) target = $region48
      $region47: #{tpu_custom_call.1} parent=5 // pred_region
        %s375 = ssub.s32 %s16, 2
        // Predicated region
        $region49: #{tpu_custom_call.1} parent=47 // pred_check
          %p376 = pneg %p129
        $region50: #{tpu_custom_call.1} parent=47 // pred_check_branch
          %378 = sbr.rel (%p376) target = $region52
        $region51: #{tpu_custom_call.1} parent=47 // pred_region
          %s379 = sand.u32 %s114, 1
          %s380 = scalar_lea.sflag [#allocation4], %s379
          %s381 = sand.u32 %s114, 1
          %s382 = smul.addr %s381, 16
          %s383 = scalar_lea.vmem [#allocation7], %s382
          %384 = dma.done %s380, 256
        $region52: #{tpu_custom_call.1} parent=47 // pred_fallthru
          _
      $region48: #{tpu_custom_call.1} parent=5 // pred_fallthru
        _
    $region6: #{tpu_custom_call.1} parent=1 // loop_footer
      %s20 = sadd.s32 1, %s16
    $region7: #{tpu_custom_call.1} parent=1 // loop_footer_branch
      %15 = sbr.rel target = $region3
    $region8: #{tpu_custom_call.1} parent=1 // loop_exit
      _
    %385 = vsyncpa [#allocation3], 1
    %s386 = scalar_lea.sflag [#allocation3], 1
    %387 = vsyncpa %s386, 1
    %388 = vsyncpa [#allocation6], 1
    %389 = vsyncpa [#allocation4], 1
    %s390 = scalar_lea.sflag [#allocation4], 1
    %391 = vsyncpa %s390, 1

</llo_original>
